<compile_context>
chip_gen: v6e
topology: v6e:2x2x1
jax: 0.10.0
libtpu: 0.0.40
codegen_flags: <defaults>
</compile_context>

<pallas_src>
import functools

import jax
import jax.numpy as jnp
from jax.experimental import pallas as pl
from jax.experimental.pallas import tpu as pltpu


def _round_up(x, m):
    return ((x + m - 1) // m) * m


def _choose_tile_r(R, max_tile_r):
    """Packed-row tile: multiple of 8 (sublane aligned), >= 2 grid steps when the
    batch is big enough (v7x megacore), and never a mostly-padding last tile."""
    max_tile_r = max(8, max_tile_r)
    if R <= max_tile_r:
        if R >= 16:                      # split so both v7x TensorCores get work
            return _round_up(pl.cdiv(R, 2), 8)
        return R                         # tiny batch: one (possibly partial) block
    n = pl.cdiv(R, max_tile_r)
    return _round_up(pl.cdiv(R, n), 8)   # balanced tiles, no near-empty tail


def _mlp_kernel(zp_ref, w1p_ref, b1p_ref, w2p_ref, b2_ref, out_ref, *, mxu_dtype):
    """One packed batch tile:
       zp  (tile_r, 120) : 8 batch rows per packed row (lane-dense)
       w1p (120, 256)    : block-diag replication of W1^T (8 copies)
       b1p (1, 256)      : 8 copies of b1
       w2p (256, 8)      : block-diag replication of w2
       out (tile_r, 8)   : y for the same 8-row packing
    """
    zp = zp_ref[...].astype(mxu_dtype)
    w1p = w1p_ref[...].astype(mxu_dtype)
    h = jnp.dot(zp, w1p, preferred_element_type=jnp.float32)        # (tile_r, 256)
    h = jnp.maximum(h + b1p_ref[...], 0.0)                          # bias+ReLU in f32

    w2p = w2p_ref[...].astype(mxu_dtype)
    y = jnp.dot(h.astype(mxu_dtype), w2p, preferred_element_type=jnp.float32)
    out_ref[...] = (y + b2_ref[0, 0]).astype(out_ref.dtype)         # (tile_r, 8)


def latent_predictor_x16(z, w1, b1, w2, b2, *, max_tile_rows=32768,
                         mxu_dtype=jnp.float32):
    """Forward pass of LatentPredictor_x16.

    z:  (B, 15) float32
    w1: (32, 15), b1: (32,)   -- torch nn.Linear(15, 32) layout
    w2: (1, 32),  b2: (1,)    -- torch nn.Linear(32, 1) layout
    returns (B, 1) float32
    """
    B, F = z.shape
    assert F == 15, "LatentPredictor_x16 expects 15 input features"

    z = z.astype(jnp.float32)
    # Pack 8 batch rows per packed row.  For contiguous row-major z this reshape
    # is free (no HBM pass); only batches not divisible by 8 pay a small pad.
    B8 = _round_up(B, 8)
    if B8 != B:
        z = jnp.pad(z, ((0, B8 - B), (0, 0)))
    R = B8 // 8
    zp = z.reshape(R, 8 * F)                                        # (R, 120)

    f32 = jnp.float32
    eye8 = jnp.eye(8, dtype=f32)
    w1p = jnp.kron(eye8, w1.astype(f32).T)                          # (120, 256)
    b1p = jnp.tile(b1.astype(f32), 8).reshape(1, 256)               # (1, 256)
    w2p = jnp.kron(eye8, w2.astype(f32).reshape(32, 1))             # (256, 8)
    b2s = b2.astype(f32).reshape(1, 1)                              # scalar in SMEM

    tile_r = _choose_tile_r(R, max_tile_rows // 8)
    grid = (pl.cdiv(R, tile_r),)

    flops = 2 * B8 * (15 * 32 + 32)
    bytes_accessed = 4 * (B8 * 15 + B8 + w1p.size + b1p.size + w2p.size + 1)

    kernel = functools.partial(_mlp_kernel, mxu_dtype=mxu_dtype)
    yp = pl.pallas_call(
        kernel,
        out_shape=jax.ShapeDtypeStruct((R, 8), jnp.float32),
        grid_spec=pl.GridSpec(
            grid=grid,
            in_specs=[
                pl.BlockSpec((tile_r, 8 * F), lambda i: (i, 0)),     # streamed z tile
                pl.BlockSpec((8 * F, 256), lambda i: (0, 0)),        # W1p, VMEM-resident
                pl.BlockSpec((1, 256), lambda i: (0, 0)),            # b1p, VMEM-resident
                pl.BlockSpec((256, 8), lambda i: (0, 0)),            # w2p, VMEM-resident
                pl.BlockSpec(memory_space=pltpu.MemorySpace.SMEM),   # b2 scalar
            ],
            out_specs=pl.BlockSpec((tile_r, 8), lambda i: (i, 0)),   # packed output tile
        ),
        compiler_params=pltpu.CompilerParams(
            dimension_semantics=("parallel",),
            vmem_limit_bytes=32 * 1024 * 1024,
        ),
        cost_estimate=pl.CostEstimate(
            flops=flops, transcendentals=0, bytes_accessed=bytes_accessed),
    )(zp, w1p, b1p, w2p, b2s)

    return yp.reshape(B8, 1)[:B]                                     # back to (B, 1)


def init_params(key):
    """Mimics torch.nn.Linear default init (uniform(+-1/sqrt(fan_in)))."""
    k1, k2, k3, k4 = jax.random.split(key, 4)
    bound1 = 1.0 / jnp.sqrt(15.0)
    bound2 = 1.0 / jnp.sqrt(32.0)
    w1 = jax.random.uniform(k1, (32, 15), jnp.float32, -bound1, bound1)
    b1 = jax.random.uniform(k2, (32,), jnp.float32, -bound1, bound1)
    w2 = jax.random.uniform(k3, (1, 32), jnp.float32, -bound2, bound2)
    b2 = jax.random.uniform(k4, (1,), jnp.float32, -bound2, bound2)
    return w1, b1, w2, b2


def reference_forward(z, w1, b1, w2, b2):
    h = jnp.maximum(z @ w1.T + b1, 0.0)
    return h @ w2.T + b2


if __name__ == "__main__":
    key = jax.random.PRNGKey(0)
    kz1, kz2, kz3, kp = jax.random.split(key, 4)
    w1, b1, w2, b2 = init_params(kp)

    # Small batch: single (partial) packed block.
    B = 8
    z = jax.random.normal(kz1, (B, 15), jnp.float32)
    out = jax.block_until_ready(latent_predictor_x16(z, w1, b1, w2, b2))
    ref = reference_forward(z, w1, b1, w2, b2)
    assert out.shape == (B, 1)
    assert jnp.allclose(out, ref, atol=1e-5, rtol=1e-5), "mismatch vs reference (B=8)"

    # Ragged batch (not /8, not a tile multiple) exercising several grid steps
    # and a partial last block.
    B2 = 300
    z2 = jax.random.normal(kz2, (B2, 15), jnp.float32)
    out2 = jax.block_until_ready(
        latent_predictor_x16(z2, w1, b1, w2, b2, max_tile_rows=128))
    ref2 = reference_forward(z2, w1, b1, w2, b2)
    assert out2.shape == (B2, 1)
    assert jnp.allclose(out2, ref2, atol=1e-5, rtol=1e-5), "mismatch vs reference (B=300)"

    # Default tiling path (>= 2 grid steps for megacore) in f32.
    B3 = 1024
    z3 = jax.random.normal(kz3, (B3, 15), jnp.float32)
    out3 = jax.block_until_ready(latent_predictor_x16(z3, w1, b1, w2, b2))
    ref3 = reference_forward(z3, w1, b1, w2, b2)
    assert out3.shape == (B3, 1)
    assert jnp.allclose(out3, ref3, atol=1e-5, rtol=1e-5), "mismatch vs reference (B=1024)"

    # Optional bf16 MXU-operand path (accumulation stays f32) -- loose tolerance.
    out3_bf16 = jax.block_until_ready(
        latent_predictor_x16(z3, w1, b1, w2, b2, mxu_dtype=jnp.bfloat16))
    assert jnp.allclose(out3_bf16, ref3, atol=5e-2, rtol=5e-2), "mismatch (bf16 MXU path)"

    print("KERNEL_OK")
</pallas_src>

<mosaic_0001>
module attributes {stable_mosaic.version = 11 : i64} {
  func.func @_mlp_kernel(%arg0: i32, %arg1: memref<1x120xf32, #tpu.memory_space<vmem>>, %arg2: memref<120x256xf32, #tpu.memory_space<vmem>>, %arg3: memref<1x256xf32, #tpu.memory_space<vmem>>, %arg4: memref<256x8xf32, #tpu.memory_space<vmem>>, %arg5: memref<1x1xf32, #tpu.memory_space<smem>>, %arg6: memref<1x8xf32, #tpu.memory_space<vmem>>) attributes {dimension_semantics = [#tpu.dimension_semantics<parallel>], iteration_bounds = array<i64: 1>, scalar_prefetch = 0 : i64, scratch_operands = 0 : i64, tpu.core_type = #tpu.core_type<tc>, window_params = [{transform_indices = @transform_0, window_bounds = array<i64: 1, 120>}, {pipeline_mode = #tpu.pipeline_mode<synchronous>, transform_indices = @transform_1, window_bounds = array<i64: 120, 256>}, {pipeline_mode = #tpu.pipeline_mode<synchronous>, transform_indices = @transform_2, window_bounds = array<i64: 1, 256>}, {pipeline_mode = #tpu.pipeline_mode<synchronous>, transform_indices = @transform_3, window_bounds = array<i64: 256, 8>}, {transform_indices = @transform_4, window_bounds = array<i64: 1, 1>}, {transform_indices = @transform_5, window_bounds = array<i64: 1, 8>}]} {
    %c0 = arith.constant 0 : index
    %c0_0 = arith.constant 0 : index
    %0 = vector.load %arg1[%c0, %c0_0] : memref<1x120xf32, #tpu.memory_space<vmem>>, vector<1x120xf32>
    %c0_1 = arith.constant 0 : index
    %c0_2 = arith.constant 0 : index
    %1 = vector.load %arg2[%c0_1, %c0_2] : memref<120x256xf32, #tpu.memory_space<vmem>>, vector<120x256xf32>
    %cst = arith.constant dense<0.000000e+00> : vector<1x256xf32>
    %2 = tpu.matmul %0, %1, %cst {dimension_numbers = #tpu.dot_dimension_numbers<[1], [0], [0], [1], [0, 0, 1, 1], [], []>} : vector<1x120xf32>, vector<120x256xf32>, vector<1x256xf32> -> vector<1x256xf32>
    %c0_3 = arith.constant 0 : index
    %c0_4 = arith.constant 0 : index
    %3 = vector.load %arg3[%c0_3, %c0_4] : memref<1x256xf32, #tpu.memory_space<vmem>>, vector<1x256xf32>
    %4 = arith.addf %2, %3 : vector<1x256xf32>
    %cst_5 = arith.constant 0.000000e+00 : f32
    %5 = vector.broadcast %cst_5 : f32 to vector<1x256xf32>
    %6 = arith.maximumf %4, %5 : vector<1x256xf32>
    %c0_6 = arith.constant 0 : index
    %c0_7 = arith.constant 0 : index
    %7 = vector.load %arg4[%c0_6, %c0_7] : memref<256x8xf32, #tpu.memory_space<vmem>>, vector<256x8xf32>
    %cst_8 = arith.constant dense<0.000000e+00> : vector<1x8xf32>
    %8 = tpu.matmul %6, %7, %cst_8 {dimension_numbers = #tpu.dot_dimension_numbers<[1], [0], [0], [1], [0, 0, 1, 1], [], []>} : vector<1x256xf32>, vector<256x8xf32>, vector<1x8xf32> -> vector<1x8xf32>
    %c0_9 = arith.constant 0 : index
    %c0_10 = arith.constant 0 : index
    %9 = memref.load %arg5[%c0_9, %c0_10] : memref<1x1xf32, #tpu.memory_space<smem>>
    %10 = vector.broadcast %9 : f32 to vector<1x8xf32>
    %11 = arith.addf %8, %10 : vector<1x8xf32>
    %c0_11 = arith.constant 0 : index
    %c0_12 = arith.constant 0 : index
    %12 = vector.load %arg6[%c0_11, %c0_12] : memref<1x8xf32, #tpu.memory_space<vmem>>, vector<1x8xf32>
    tpu.vector_store %arg6[%c0_11, %c0_12], %11 {strides = array<i32>} : memref<1x8xf32, #tpu.memory_space<vmem>>, vector<1x8xf32>,
    return
  }
  func.func @transform_0(%arg0: i32) -> (i32, i32) {
    %c0_i32 = arith.constant 0 : i32
    %c0_i32_0 = arith.constant 0 : i32
    return %arg0, %c0_i32 : i32, i32
  }
  func.func @transform_1(%arg0: i32) -> (i32, i32) {
    %c0_i32 = arith.constant 0 : i32
    %c0_i32_0 = arith.constant 0 : i32
    %c0_i32_1 = arith.constant 0 : i32
    return %c0_i32, %c0_i32_0 : i32, i32
  }
  func.func @transform_2(%arg0: i32) -> (i32, i32) {
    %c0_i32 = arith.constant 0 : i32
    %c0_i32_0 = arith.constant 0 : i32
    %c0_i32_1 = arith.constant 0 : i32
    return %c0_i32, %c0_i32_0 : i32, i32
  }
  func.func @transform_3(%arg0: i32) -> (i32, i32) {
    %c0_i32 = arith.constant 0 : i32
    %c0_i32_0 = arith.constant 0 : i32
    %c0_i32_1 = arith.constant 0 : i32
    return %c0_i32, %c0_i32_0 : i32, i32
  }
  func.func @transform_4(%arg0: i32) -> (i32, i32) {
    %c0_i32 = arith.constant 0 : i32
    %c0_i32_0 = arith.constant 0 : i32
    %c0_i32_1 = arith.constant 0 : i32
    return %c0_i32, %c0_i32_0 : i32, i32
  }
  func.func @transform_5(%arg0: i32) -> (i32, i32) {
    %c0_i32 = arith.constant 0 : i32
    %c0_i32_0 = arith.constant 0 : i32
    return %arg0, %c0_i32 : i32, i32
  }
}

</mosaic_0001>

<llo_original>
// kernel: tpu_custom_call.1
$region0: #{tpu_custom_call.1}
  #allocation0 [shape = 'u32[]', space=smem, size = 0x4, offset = 0x4, fixed_abs, tag = 'smem constant byte address 0x4 - core index']
  #allocation1 [shape = 'u32[144,128]{1,0:T(1,128)}', space=vmem, size = 0x12000, scoped, tag = 'internal scratch']
  #allocation2 [shape = 'f32[1,1]{1,0:T(1,128)S(6)}', space=smem, size = 0x200, scoped, tag = 'scoped memory for tpu_custom_call.1']
  %s0 = inlined_call_operand.vmem [shape: f32[1,120], index: 0, kind: input, shape index: {}]
  %s1 = inlined_call_operand.vmem [shape: f32[120,256], index: 1, kind: input, shape index: {}]
  %s2 = inlined_call_operand.vmem [shape: f32[1,256], index: 2, kind: input, shape index: {}]
  %s3 = inlined_call_operand.vmem [shape: f32[256,8], index: 3, kind: input, shape index: {}]
  %s4 = inlined_call_operand.<no memory space> [shape: f32[1,1], index: 4, kind: input, shape index: {}]
  %s5 = inlined_call_operand.hbm [shape: f32[1,8], index: 5, kind: output, shape index: {}]
  %s6 = sld [smem:[#allocation0]]
  $region30: #{tpu_custom_call.1} parent=0
    _
  %s8 = ssub.s32 1, %s6
  %s9 = scalar_select 0, %s8, %s6
  %10 = sst [smem:[#allocation2]] %s4
  $region1: #{tpu_custom_call.1} parent=0
    #allocation3 [shape = 'u8[512]{0}', space=vmem, size = 0x400, scoped, tag = 'output window, operand 0, single buffered']
    #allocation4 [shape = 's32[1]{0}', space=sflag, size = 0x4, scoped, tag = 'scoped memory for tpu_custom_call.1']
    %11 = vsyncpa [#allocation4], 0
    // Predicated region
    $region2: #{tpu_custom_call.1} parent=1 // pred_check
      _
    $region3: #{tpu_custom_call.1} parent=1 // pred_check_branch
      %13 = sbr.rel (0) target = $region5
    $region4: #{tpu_custom_call.1} parent=1 // pred_region
      _
    $region5: #{tpu_custom_call.1} parent=1 // pred_fallthru
      _
    // Predicated region
    $region6: #{tpu_custom_call.1} parent=1 // pred_check
      _
    $region7: #{tpu_custom_call.1} parent=1 // pred_check_branch
      %15 = sbr.rel (0) target = $region9
    $region8: #{tpu_custom_call.1} parent=1 // pred_region
      _
    $region9: #{tpu_custom_call.1} parent=1 // pred_fallthru
      _
    // Predicated region
    $region10: #{tpu_custom_call.1} parent=1 // pred_check
      _
    $region11: #{tpu_custom_call.1} parent=1 // pred_check_branch
      %17 = sbr.rel (0) target = $region13
    $region12: #{tpu_custom_call.1} parent=1 // pred_region
      _
    $region13: #{tpu_custom_call.1} parent=1 // pred_fallthru
      _
    // Predicated region
    $region14: #{tpu_custom_call.1} parent=1 // pred_check
      _
    $region15: #{tpu_custom_call.1} parent=1 // pred_check_branch
      %19 = sbr.rel (0) target = $region17
    $region16: #{tpu_custom_call.1} parent=1 // pred_region
      _
    $region17: #{tpu_custom_call.1} parent=1 // pred_fallthru
      _
    // Predicated region
    $region18: #{tpu_custom_call.1} parent=1 // pred_check
      _
    $region19: #{tpu_custom_call.1} parent=1 // pred_check_branch
      %21 = sbr.rel (0) target = $region21
    $region20: #{tpu_custom_call.1} parent=1 // pred_region
      _
    $region21: #{tpu_custom_call.1} parent=1 // pred_fallthru
      _
    %v22 = vld [vmem:[%s0] sm:$0x1]
    %v23 = vld [vmem:[%s1] sm:$0xff]
    %v24 = vld [vmem:[%s1 + $0x8] sm:$0xff]
    %v25 = vld [vmem:[%s1 + $0x10] sm:$0xff]
    %v26 = vld [vmem:[%s1 + $0x18] sm:$0xff]
    %v27 = vld [vmem:[%s1 + $0x20] sm:$0xff]
    %v28 = vld [vmem:[%s1 + $0x28] sm:$0xff]
    %v29 = vld [vmem:[%s1 + $0x30] sm:$0xff]
    %v30 = vld [vmem:[%s1 + $0x38] sm:$0xff]
    %v31 = vld [vmem:[%s1 + $0x40] sm:$0xff]
    %v32 = vld [vmem:[%s1 + $0x48] sm:$0xff]
    %v33 = vld [vmem:[%s1 + $0x50] sm:$0xff]
    %v34 = vld [vmem:[%s1 + $0x58] sm:$0xff]
    %v35 = vld [vmem:[%s1 + $0x60] sm:$0xff]
    %v36 = vld [vmem:[%s1 + $0x68] sm:$0xff]
    %v37 = vld [vmem:[%s1 + $0x70] sm:$0xff]
    %v38 = vld [vmem:[%s1 + $0x78] sm:$0xff]
    %v39 = vld [vmem:[%s1 + $0x80] sm:$0xff]
    %v40 = vld [vmem:[%s1 + $0x88] sm:$0xff]
    %v41 = vld [vmem:[%s1 + $0x90] sm:$0xff]
    %v42 = vld [vmem:[%s1 + $0x98] sm:$0xff]
    %v43 = vld [vmem:[%s1 + $0xa0] sm:$0xff]
    %v44 = vld [vmem:[%s1 + $0xa8] sm:$0xff]
    %v45 = vld [vmem:[%s1 + $0xb0] sm:$0xff]
    %v46 = vld [vmem:[%s1 + $0xb8] sm:$0xff]
    %v47 = vld [vmem:[%s1 + $0xc0] sm:$0xff]
    %v48 = vld [vmem:[%s1 + $0xc8] sm:$0xff]
    %v49 = vld [vmem:[%s1 + $0xd0] sm:$0xff]
    %v50 = vld [vmem:[%s1 + $0xd8] sm:$0xff]
    %v51 = vld [vmem:[%s1 + $0xe0] sm:$0xff]
    %v52 = vld [vmem:[%s1 + $0xe8] sm:$0xff]
    %v53 = vld [vmem:[%s2] sm:$0x3]
    %v55 = vlaneseq
    %v56 = vshrl.u32 %v55, 7
    %v57 = vsub.s32 0, %v56
    %v58 = vrot.slane %v53, %v57
    %v59 = vlaneseq
    %v60 = vshrl.u32 %v59, 7
    %v61 = vsub.s32 1, %v60
    %v62 = vrot.slane %v53, %v61
    %vm65 = vcmask 982016
    %v67 = vsel %vm65, %v22, 0
    %69 = vmatprep.subr.mxu0 0.0
    %70 = vmatpush1.msra.mxu0 0.0
    %71 = vmatprep.subr.mxu0 %v52
    %72 = vmatpush1.msra.mxu0 %v51
    %73 = vmatprep.subr.mxu0 %v50
    %74 = vmatpush1.msra.mxu0 %v49
    %75 = vmatprep.subr.mxu0 %v48
    %76 = vmatpush1.msra.mxu0 %v47
    %77 = vmatprep.subr.mxu0 %v46
    %78 = vmatpush1.msra.mxu0 %v45
    %79 = vmatprep.subr.mxu0 %v44
    %80 = vmatpush1.msra.mxu0 %v43
    %81 = vmatprep.subr.mxu0 %v42
    %82 = vmatpush1.msra.mxu0 %v41
    %83 = vmatprep.subr.mxu0 %v40
    %84 = vmatpush1.msra.mxu0 %v39
    %85 = vmatprep.subr.mxu0 %v38
    %86 = vmatpush1.msra.mxu0 %v37
    %87 = vmatprep.subr.mxu0 %v36
    %88 = vmatpush1.msra.mxu0 %v35
    %89 = vmatprep.subr.mxu0 %v34
    %90 = vmatpush1.msra.mxu0 %v33
    %91 = vmatprep.subr.mxu0 %v32
    %92 = vmatpush1.msra.mxu0 %v31
    %93 = vmatprep.subr.mxu0 %v30
    %94 = vmatpush1.msra.mxu0 %v29
    %95 = vmatprep.subr.mxu0 %v28
    %96 = vmatpush1.msra.mxu0 %v27
    %97 = vmatprep.subr.mxu0 %v26
    %98 = vmatpush1.msra.mxu0 %v25
    %99 = vmatprep.subr.mxu0 %v24
    %100 = vmatpush1.msra.mxu0 %v23
    %101 = vmatprep.subr.mxu0 0.0
    %102 = vmatpush2.msra.mxu0 0.0
    %103 = vmatprep.subr.mxu0 0.0
    %104 = vmatpush2.msra.mxu0 0.0
    %105 = vmatprep.subr.mxu0 0.0
    %106 = vmatpush2.msra.mxu0 0.0
    %107 = vmatprep.subr.mxu0 0.0
    %108 = vmatpush2.msra.mxu0 0.0
    %109 = vmatprep.subr.mxu0 0.0
    %110 = vmatpush2.msra.mxu0 0.0
    %111 = vmatprep.subr.mxu0 0.0
    %112 = vmatpush2.msra.mxu0 0.0
    %113 = vmatprep.subr.mxu0 0.0
    %114 = vmatpush2.msra.mxu0 0.0
    %115 = vmatprep.subr.mxu0 0.0
    %116 = vmatpush2.msra.mxu0 0.0
    %117 = vmatprep.subr.mxu0 0.0
    %118 = vmatpush2.msra.mxu0 0.0
    %119 = vmatprep.subr.mxu0 0.0
    %120 = vmatpush2.msra.mxu0 0.0
    %121 = vmatprep.subr.mxu0 0.0
    %122 = vmatpush2.msra.mxu0 0.0
    %123 = vmatprep.subr.mxu0 0.0
    %124 = vmatpush2.msra.mxu0 0.0
    %125 = vmatprep.subr.mxu0 0.0
    %126 = vmatpush2.msra.mxu0 0.0
    %127 = vmatprep.subr.mxu0 0.0
    %128 = vmatpush2.msra.mxu0 0.0
    %129 = vmatprep.subr.mxu0 0.0
    %130 = vmatpush2.msra.mxu0 0.0
    %131 = vmatprep.subr.mxu0 0.0
    %132 = vmatpush2.msra.mxu0 0.0
    %133 = vmatprep.mubr.f32.mxu0 0.0
    %134 = vmatmul.mubr.f32.gmra.mxu0 %v67
    %v135 = vpop.f32.mrf.mxu0
    %v136 = vadd.f32 %v58, %v135
    %v137 = vpop.f32.mrf.mxu0
    %v138 = vadd.f32 %v62, %v137
    %139 = vdwg.mxu0
    %v140 = vmax.f32 %v136, 0.0
    %v141 = vmax.f32 %v138, 0.0
    %v142 = vld [vmem:[%s3] sm:$0xff]
    %v143 = vld [vmem:[%s3 + $0x8] sm:$0xff]
    %v144 = vld [vmem:[%s3 + $0x10] sm:$0xff]
    %v145 = vld [vmem:[%s3 + $0x18] sm:$0xff]
    %v146 = vld [vmem:[%s3 + $0x20] sm:$0xff]
    %v147 = vld [vmem:[%s3 + $0x28] sm:$0xff]
    %v148 = vld [vmem:[%s3 + $0x30] sm:$0xff]
    %v149 = vld [vmem:[%s3 + $0x38] sm:$0xff]
    %v150 = vld [vmem:[%s3 + $0x40] sm:$0xff]
    %v151 = vld [vmem:[%s3 + $0x48] sm:$0xff]
    %v152 = vld [vmem:[%s3 + $0x50] sm:$0xff]
    %v153 = vld [vmem:[%s3 + $0x58] sm:$0xff]
    %v154 = vld [vmem:[%s3 + $0x60] sm:$0xff]
    %v155 = vld [vmem:[%s3 + $0x68] sm:$0xff]
    %v156 = vld [vmem:[%s3 + $0x70] sm:$0xff]
    %v157 = vld [vmem:[%s3 + $0x78] sm:$0xff]
    %v158 = vld [vmem:[%s3 + $0x80] sm:$0xff]
    %v159 = vld [vmem:[%s3 + $0x88] sm:$0xff]
    %v160 = vld [vmem:[%s3 + $0x90] sm:$0xff]
    %v161 = vld [vmem:[%s3 + $0x98] sm:$0xff]
    %v162 = vld [vmem:[%s3 + $0xa0] sm:$0xff]
    %v163 = vld [vmem:[%s3 + $0xa8] sm:$0xff]
    %v164 = vld [vmem:[%s3 + $0xb0] sm:$0xff]
    %v165 = vld [vmem:[%s3 + $0xb8] sm:$0xff]
    %v166 = vld [vmem:[%s3 + $0xc0] sm:$0xff]
    %v167 = vld [vmem:[%s3 + $0xc8] sm:$0xff]
    %v168 = vld [vmem:[%s3 + $0xd0] sm:$0xff]
    %v169 = vld [vmem:[%s3 + $0xd8] sm:$0xff]
    %v170 = vld [vmem:[%s3 + $0xe0] sm:$0xff]
    %v171 = vld [vmem:[%s3 + $0xe8] sm:$0xff]
    %v172 = vld [vmem:[%s3 + $0xf0] sm:$0xff]
    %v173 = vld [vmem:[%s3 + $0xf8] sm:$0xff]
    %s174 = sld [smem:[#allocation2]]
    %v175 = vstv %s174
    %176 = vmatprep.subr.mxu0 0.0
    %177 = vmatpush1.msra.mxu0 %v157
    %178 = vmatprep.subr.mxu0 0.0
    %179 = vmatpush1.msra.mxu0 %v156
    %180 = vmatprep.subr.mxu0 0.0
    %181 = vmatpush1.msra.mxu0 %v155
    %182 = vmatprep.subr.mxu0 0.0
    %183 = vmatpush1.msra.mxu0 %v154
    %184 = vmatprep.subr.mxu0 0.0
    %185 = vmatpush1.msra.mxu0 %v153
    %186 = vmatprep.subr.mxu0 0.0
    %187 = vmatpush1.msra.mxu0 %v152
    %188 = vmatprep.subr.mxu0 0.0
    %189 = vmatpush1.msra.mxu0 %v151
    %190 = vmatprep.subr.mxu0 0.0
    %191 = vmatpush1.msra.mxu0 %v150
    %192 = vmatprep.subr.mxu0 0.0
    %193 = vmatpush1.msra.mxu0 %v149
    %194 = vmatprep.subr.mxu0 0.0
    %195 = vmatpush1.msra.mxu0 %v148
    %196 = vmatprep.subr.mxu0 0.0
    %197 = vmatpush1.msra.mxu0 %v147
    %198 = vmatprep.subr.mxu0 0.0
    %199 = vmatpush1.msra.mxu0 %v146
    %200 = vmatprep.subr.mxu0 0.0
    %201 = vmatpush1.msra.mxu0 %v145
    %202 = vmatprep.subr.mxu0 0.0
    %203 = vmatpush1.msra.mxu0 %v144
    %204 = vmatprep.subr.mxu0 0.0
    %205 = vmatpush1.msra.mxu0 %v143
    %206 = vmatprep.subr.mxu0 0.0
    %207 = vmatpush1.msra.mxu0 %v142
    %208 = vmatprep.subr.mxu0 0.0
    %209 = vmatpush2.msra.mxu0 %v173
    %210 = vmatprep.subr.mxu0 0.0
    %211 = vmatpush2.msra.mxu0 %v172
    %212 = vmatprep.subr.mxu0 0.0
    %213 = vmatpush2.msra.mxu0 %v171
    %214 = vmatprep.subr.mxu0 0.0
    %215 = vmatpush2.msra.mxu0 %v170
    %216 = vmatprep.subr.mxu0 0.0
    %217 = vmatpush2.msra.mxu0 %v169
    %218 = vmatprep.subr.mxu0 0.0
    %219 = vmatpush2.msra.mxu0 %v168
    %220 = vmatprep.subr.mxu0 0.0
    %221 = vmatpush2.msra.mxu0 %v167
    %222 = vmatprep.subr.mxu0 0.0
    %223 = vmatpush2.msra.mxu0 %v166
    %224 = vmatprep.subr.mxu0 0.0
    %225 = vmatpush2.msra.mxu0 %v165
    %226 = vmatprep.subr.mxu0 0.0
    %227 = vmatpush2.msra.mxu0 %v164
    %228 = vmatprep.subr.mxu0 0.0
    %229 = vmatpush2.msra.mxu0 %v163
    %230 = vmatprep.subr.mxu0 0.0
    %231 = vmatpush2.msra.mxu0 %v162
    %232 = vmatprep.subr.mxu0 0.0
    %233 = vmatpush2.msra.mxu0 %v161
    %234 = vmatprep.subr.mxu0 0.0
    %235 = vmatpush2.msra.mxu0 %v160
    %236 = vmatprep.subr.mxu0 0.0
    %237 = vmatpush2.msra.mxu0 %v159
    %238 = vmatprep.subr.mxu0 0.0
    %239 = vmatpush2.msra.mxu0 %v158
    %240 = vmatprep.mubr.f32.mxu0 %v141
    %241 = vmatmul.mubr.f32.gmra.mxu0 %v140
    %v242 = vpop.f32.mrf.mxu0
    %v243 = vadd.f32 %v175, %v242
    %v244 = vpop.f32.mrf.mxu0
    %245 = vdwg.mxu0
    %vm246 = vcmask 57344
    %247 = vst.msk [vmem:[#allocation3] sm:$0x1] %vm246, %v243
    // Predicated region
    $region22: #{tpu_custom_call.1} parent=1 // pred_check
      _
    $region23: #{tpu_custom_call.1} parent=1 // pred_check_branch
      %249 = sbr.rel (0) target = $region25
    $region24: #{tpu_custom_call.1} parent=1 // pred_region
      %s251 = ssub.s32 16, 16
      %252 = vsyncadd [#allocation4], %s251
      %s254 = sshll.u32 [#allocation3], 4
      %s255 = int_to_ptr.vmem [resolvable:$true] %s254
      %257 = dma.vmem_to_hbm [thread:$0]  %s255, 16, %s5, [#allocation4]
    $region25: #{tpu_custom_call.1} parent=1 // pred_fallthru
      _
    // Predicated region
    $region26: #{tpu_custom_call.1} parent=1 // pred_check
      _
    $region27: #{tpu_custom_call.1} parent=1 // pred_check_branch
      %259 = sbr.rel (0) target = $region29
    $region28: #{tpu_custom_call.1} parent=1 // pred_region
      %260 = dma.done [#allocation4], 16
    $region29: #{tpu_custom_call.1} parent=1 // pred_fallthru
      _
    %261 = vsyncpa [#allocation4], 1

</llo_original>
